<compile_context>
chip_gen: v5e
topology: v5e:2x2
jax: 0.10.0
libtpu: 0.0.40
codegen_flags: <defaults>
</compile_context>

<pallas_src>
import functools

import jax
import jax.numpy as jnp
from jax.experimental import pallas as pl
from jax.experimental.pallas import tpu as pltpu


def _round_up(n: int, m: int) -> int:
    return ((n + m - 1) // m) * m


def _choose_tile_b(batch, pipe_rows, act_rows, param_bytes,
                   vmem_budget_bytes: int = 24 * 1024 * 1024) -> int:
    """Pick the batch (lane) tile.

    Accounting (per batch column, f32):
      * pipelined x/out tiles are double-buffered by the BlockSpec pipeline  -> x2
      * intermediate activations live once per step
      * parameters are tile-invariant single-copy VMEM residents -> fixed bytes
    Target: as many lanes as the (v7x-sized) scoped-VMEM budget allows, capped at 2048,
    while keeping >= 2 grid steps for batches spanning more than one 128-lane tile so the
    v7x megacore can shard the batch axis across both TensorCores.
    """
    per_col = 4 * (2 * sum(_round_up(r, 8) for r in pipe_rows)
                   + sum(_round_up(r, 8) for r in act_rows))
    budget = max(vmem_budget_bytes - param_bytes, 1 << 20)
    cap = max(128, (budget // max(per_col, 1)) // 128 * 128)
    pb = _round_up(max(int(batch), 1), 128)
    tile = min(cap, 2048, pb)
    if pb > 128:
        # keep at least 2 grid steps so both v7x TensorCores get work
        tile = min(tile, max(128, _round_up((pb + 1) // 2, 128)))
    return max(128, (tile // 128) * 128)


def make_senn_kernel(num_layers: int):
    """Builds the Pallas kernel body for a given FeedForward depth (batch-in-lanes)."""

    def kernel(*refs):
        # refs = (x_T, W0, b0, ..., W_{L-1}, b_{L-1}, R, S_T, senn_bias, out_T)
        x_ref = refs[0]
        wb_refs = refs[1:1 + 2 * num_layers]
        rep_ref = refs[1 + 2 * num_layers]       # (O*I, I)  row-replication matrix
        sel_ref = refs[2 + 2 * num_layers]       # (O, O*I)  group-sum matrix
        bias_ref = refs[3 + 2 * num_layers]      # (O, 1)
        out_ref = refs[4 + 2 * num_layers]       # (O, TILE_B)

        x = x_ref[...]                            # (I, TILE_B) f32, batch on lanes

        # ---- theta(x)^T: (Linear -> [Dropout=id] -> ReLU) x (L-1), then Linear ----
        h = x
        for layer in range(num_layers):
            w = wb_refs[2 * layer][...]           # (out, in)
            b = wb_refs[2 * layer + 1][...]       # (out, 1), broadcasts over lanes
            h = jnp.dot(w, h, preferred_element_type=jnp.float32) + b
            if layer < num_layers - 1:
                h = jnp.maximum(h, 0.0)           # ReLU

        # h == coefs^T: (O*I, TILE_B), rows ordered (o, i) row-major.
        # ---- bmm on the MXU:  preds[o, b] = sum_i h[o*I + i, b] * x[i, b] ----
        # x rows replicated per output group via R on the MXU (no cross-lane shuffles),
        # then each o-group summed via S_T on the MXU.
        x_rep = jnp.dot(rep_ref[...], x, preferred_element_type=jnp.float32)   # (O*I, TB)
        prod = h * x_rep                                                        # f32 VPU
        preds = jnp.dot(sel_ref[...], prod, preferred_element_type=jnp.float32)  # (O, TB)

        out_ref[...] = preds + bias_ref[...]      # lane-dense (O, TILE_B) store

    return kernel


def senn_simple_forward(x, weights, biases, senn_bias, *, num_inputs, num_outputs,
                        tile_b=None):
    """x: (B, num_inputs) f32. weights[l]: (out_l, in_l) (nn.Linear layout); biases[l]: (out_l,)."""
    num_layers = len(weights)
    batch = x.shape[0]
    layer_out_rows = [w.shape[0] for w in weights]      # feature counts per layer output

    # ---- parameters (all f32, single VMEM-resident copy via constant index_maps) ----
    flat_params = []
    for w, b in zip(weights, biases):
        flat_params.append(w.astype(jnp.float32))
        flat_params.append(b.reshape(-1, 1).astype(jnp.float32))
    # R: (O*I, I), R[o*I + i, i] = 1  -> replicates x's rows once per output group.
    rep = jnp.tile(jnp.eye(num_inputs, dtype=jnp.float32), (num_outputs, 1))
    # S_T: (O, O*I), S_T[o, o*I + i] = 1  -> sums each o-group of the products.
    sel_t = jnp.repeat(jnp.eye(num_outputs, dtype=jnp.float32), num_inputs, axis=1)
    flat_params.append(rep)
    flat_params.append(sel_t)
    flat_params.append(senn_bias.reshape(-1, 1).astype(jnp.float32))
    param_bytes = sum(int(p.size) * 4 for p in flat_params)

    # ---- batch (lane) tiling ----
    if tile_b is None:
        pipe_rows = [num_inputs, num_outputs]                 # x in, preds out (pipelined)
        act_rows = layer_out_rows + [num_outputs * num_inputs] * 2   # h's, x_rep, prod
        tile_b = _choose_tile_b(batch, pipe_rows, act_rows, param_bytes)
    tile_b = max(128, _round_up(int(tile_b), 128))

    padded_batch = _round_up(batch, tile_b)
    x_t = x.T                                                  # (I, B) — cheap XLA transpose
    if padded_batch != batch:
        x_t = jnp.pad(x_t, ((0, 0), (0, padded_batch - batch)))
    grid = (padded_batch // tile_b,)

    kernel = make_senn_kernel(num_layers)

    x_spec = pl.BlockSpec((num_inputs, tile_b), lambda i: (0, i))
    # Whole-array, constant-index specs -> params stay resident in VMEM across steps.
    param_specs = [pl.BlockSpec(p.shape, lambda i: (0, 0)) for p in flat_params]
    out_spec = pl.BlockSpec((num_outputs, tile_b), lambda i: (0, i))

    out_t = pl.pallas_call(
        kernel,
        out_shape=jax.ShapeDtypeStruct((num_outputs, padded_batch), jnp.float32),
        grid=grid,
        in_specs=[x_spec] + param_specs,
        out_specs=out_spec,
        compiler_params=pltpu.CompilerParams(
            dimension_semantics=("parallel",),          # batch axis shards across v7x TCs
            vmem_limit_bytes=32 * 1024 * 1024,          # explicit, <= v7x physical VMEM
        ),
    )(x_t, *flat_params)

    # Transpose back to (B, O) and drop padded rows (garbage-but-finite, zero-padded x).
    return out_t.T[:batch]


def reference_forward(x, weights, biases, senn_bias, *, num_inputs, num_outputs):
    h = x
    num_layers = len(weights)
    for layer in range(num_layers):
        h = h @ weights[layer].T + biases[layer]
        if layer < num_layers - 1:
            h = jnp.maximum(h, 0.0)
    coefs = h.reshape(x.shape[0], num_outputs, num_inputs)
    preds = jnp.einsum("boi,bi->bo", coefs, x) + senn_bias
    return preds


if __name__ == "__main__":
    # Module hyperparameters (small, consistent with SENN_Simple.__init__)
    batch = 8
    num_inputs = 16
    num_outputs = 4
    num_hidden = 32
    num_layers = 3
    # dropout=0.1 (identity at inference), activation='relu',
    # activation_last=None, dropout_last=False, layer_norm=False

    key = jax.random.PRNGKey(0)
    keys = jax.random.split(key, 2 + 2 * num_layers)
    kx, kx2 = keys[0], keys[1]
    kws = keys[2:]

    in_sizes = [num_inputs] + [num_hidden] * (num_layers - 1)
    out_sizes = [num_hidden] * (num_layers - 1) + [num_inputs * num_outputs]

    weights, biases = [], []
    for l, (ni, no) in enumerate(zip(in_sizes, out_sizes)):
        scale = float(ni) ** -0.5
        # Stored as (out, in): same layout as the PyTorch nn.Linear weight.
        weights.append(jax.random.uniform(kws[2 * l], (no, ni), jnp.float32, -scale, scale))
        biases.append(jax.random.uniform(kws[2 * l + 1], (no,), jnp.float32, -scale, scale))

    senn_bias = jnp.zeros((num_outputs,), dtype=jnp.float32)  # torch.zeros(num_outputs)

    x = jax.random.normal(kx, (batch, num_inputs), dtype=jnp.float32)

    fwd = functools.partial(senn_simple_forward,
                            num_inputs=num_inputs, num_outputs=num_outputs)

    # ---- small batch, single-tile grid ----
    out = jax.block_until_ready(fwd(x, weights, biases, senn_bias))
    ref = reference_forward(x, weights, biases, senn_bias,
                            num_inputs=num_inputs, num_outputs=num_outputs)
    assert out.shape == (batch, num_outputs)
    # Tolerance allows for TPU default-precision (bf16-pass) matmul lowering differences.
    assert jnp.allclose(out, ref, atol=2e-2, rtol=2e-2), "kernel mismatch vs reference"

    # ---- larger batch: auto tile choice, >= 2 grid steps, padding + pipelining ----
    batch2 = 300
    x2 = jax.random.normal(kx2, (batch2, num_inputs), dtype=jnp.float32)
    out2 = jax.block_until_ready(fwd(x2, weights, biases, senn_bias))
    ref2 = reference_forward(x2, weights, biases, senn_bias,
                             num_inputs=num_inputs, num_outputs=num_outputs)
    assert out2.shape == (batch2, num_outputs)
    assert jnp.allclose(out2, ref2, atol=2e-2, rtol=2e-2), "gridded kernel mismatch vs reference"

    # ---- explicit tile override path ----
    out3 = jax.block_until_ready(fwd(x2, weights, biases, senn_bias, tile_b=128))
    assert jnp.allclose(out3, ref2, atol=2e-2, rtol=2e-2), "tile_b=128 kernel mismatch vs reference"

    print("KERNEL_OK")
</pallas_src>

<mosaic_0001>
module attributes {stable_mosaic.version = 11 : i64} {
  func.func @kernel(%arg0: i32, %arg1: memref<16x128xf32, #tpu.memory_space<vmem>>, %arg2: memref<32x16xf32, #tpu.memory_space<vmem>>, %arg3: memref<32x1xf32, #tpu.memory_space<vmem>>, %arg4: memref<32x32xf32, #tpu.memory_space<vmem>>, %arg5: memref<32x1xf32, #tpu.memory_space<vmem>>, %arg6: memref<64x32xf32, #tpu.memory_space<vmem>>, %arg7: memref<64x1xf32, #tpu.memory_space<vmem>>, %arg8: memref<64x16xf32, #tpu.memory_space<vmem>>, %arg9: memref<4x64xf32, #tpu.memory_space<vmem>>, %arg10: memref<4x1xf32, #tpu.memory_space<vmem>>, %arg11: memref<4x128xf32, #tpu.memory_space<vmem>>) attributes {dimension_semantics = [#tpu.dimension_semantics<parallel>], iteration_bounds = array<i64: 1>, scalar_prefetch = 0 : i64, scratch_operands = 0 : i64, tpu.core_type = #tpu.core_type<tc>, window_params = [{transform_indices = @transform_0, window_bounds = array<i64: 16, 128>}, {pipeline_mode = #tpu.pipeline_mode<synchronous>, transform_indices = @transform_1, window_bounds = array<i64: 32, 16>}, {pipeline_mode = #tpu.pipeline_mode<synchronous>, transform_indices = @transform_2, window_bounds = array<i64: 32, 1>}, {pipeline_mode = #tpu.pipeline_mode<synchronous>, transform_indices = @transform_3, window_bounds = array<i64: 32, 32>}, {pipeline_mode = #tpu.pipeline_mode<synchronous>, transform_indices = @transform_4, window_bounds = array<i64: 32, 1>}, {pipeline_mode = #tpu.pipeline_mode<synchronous>, transform_indices = @transform_5, window_bounds = array<i64: 64, 32>}, {pipeline_mode = #tpu.pipeline_mode<synchronous>, transform_indices = @transform_6, window_bounds = array<i64: 64, 1>}, {pipeline_mode = #tpu.pipeline_mode<synchronous>, transform_indices = @transform_7, window_bounds = array<i64: 64, 16>}, {pipeline_mode = #tpu.pipeline_mode<synchronous>, transform_indices = @transform_8, window_bounds = array<i64: 4, 64>}, {pipeline_mode = #tpu.pipeline_mode<synchronous>, transform_indices = @transform_9, window_bounds = array<i64: 4, 1>}, {transform_indices = @transform_10, window_bounds = array<i64: 4, 128>}]} {
    %c0 = arith.constant 0 : index
    %c0_0 = arith.constant 0 : index
    %0 = vector.load %arg1[%c0, %c0_0] : memref<16x128xf32, #tpu.memory_space<vmem>>, vector<16x128xf32>
    %c0_1 = arith.constant 0 : index
    %c0_2 = arith.constant 0 : index
    %1 = vector.load %arg2[%c0_1, %c0_2] : memref<32x16xf32, #tpu.memory_space<vmem>>, vector<32x16xf32>
    %c0_3 = arith.constant 0 : index
    %c0_4 = arith.constant 0 : index
    %2 = vector.load %arg3[%c0_3, %c0_4] : memref<32x1xf32, #tpu.memory_space<vmem>>, vector<32x1xf32>
    %cst = arith.constant dense<0.000000e+00> : vector<32x128xf32>
    %3 = tpu.matmul %1, %0, %cst {dimension_numbers = #tpu.dot_dimension_numbers<[1], [0], [0], [1], [0, 0, 1, 1], [], []>} : vector<32x16xf32>, vector<16x128xf32>, vector<32x128xf32> -> vector<32x128xf32>
    %4 = vector.broadcast %2 : vector<32x1xf32> to vector<32x128xf32>
    %5 = arith.addf %3, %4 : vector<32x128xf32>
    %cst_5 = arith.constant 0.000000e+00 : f32
    %6 = vector.broadcast %cst_5 : f32 to vector<32x128xf32>
    %7 = arith.maximumf %5, %6 : vector<32x128xf32>
    %c0_6 = arith.constant 0 : index
    %c0_7 = arith.constant 0 : index
    %8 = vector.load %arg4[%c0_6, %c0_7] : memref<32x32xf32, #tpu.memory_space<vmem>>, vector<32x32xf32>
    %c0_8 = arith.constant 0 : index
    %c0_9 = arith.constant 0 : index
    %9 = vector.load %arg5[%c0_8, %c0_9] : memref<32x1xf32, #tpu.memory_space<vmem>>, vector<32x1xf32>
    %cst_10 = arith.constant dense<0.000000e+00> : vector<32x128xf32>
    %10 = tpu.matmul %8, %7, %cst_10 {dimension_numbers = #tpu.dot_dimension_numbers<[1], [0], [0], [1], [0, 0, 1, 1], [], []>} : vector<32x32xf32>, vector<32x128xf32>, vector<32x128xf32> -> vector<32x128xf32>
    %11 = vector.broadcast %9 : vector<32x1xf32> to vector<32x128xf32>
    %12 = arith.addf %10, %11 : vector<32x128xf32>
    %cst_11 = arith.constant 0.000000e+00 : f32
    %13 = vector.broadcast %cst_11 : f32 to vector<32x128xf32>
    %14 = arith.maximumf %12, %13 : vector<32x128xf32>
    %c0_12 = arith.constant 0 : index
    %c0_13 = arith.constant 0 : index
    %15 = vector.load %arg6[%c0_12, %c0_13] : memref<64x32xf32, #tpu.memory_space<vmem>>, vector<64x32xf32>
    %c0_14 = arith.constant 0 : index
    %c0_15 = arith.constant 0 : index
    %16 = vector.load %arg7[%c0_14, %c0_15] : memref<64x1xf32, #tpu.memory_space<vmem>>, vector<64x1xf32>
    %cst_16 = arith.constant dense<0.000000e+00> : vector<64x128xf32>
    %17 = tpu.matmul %15, %14, %cst_16 {dimension_numbers = #tpu.dot_dimension_numbers<[1], [0], [0], [1], [0, 0, 1, 1], [], []>} : vector<64x32xf32>, vector<32x128xf32>, vector<64x128xf32> -> vector<64x128xf32>
    %18 = vector.broadcast %16 : vector<64x1xf32> to vector<64x128xf32>
    %19 = arith.addf %17, %18 : vector<64x128xf32>
    %c0_17 = arith.constant 0 : index
    %c0_18 = arith.constant 0 : index
    %20 = vector.load %arg8[%c0_17, %c0_18] : memref<64x16xf32, #tpu.memory_space<vmem>>, vector<64x16xf32>
    %cst_19 = arith.constant dense<0.000000e+00> : vector<64x128xf32>
    %21 = tpu.matmul %20, %0, %cst_19 {dimension_numbers = #tpu.dot_dimension_numbers<[1], [0], [0], [1], [0, 0, 1, 1], [], []>} : vector<64x16xf32>, vector<16x128xf32>, vector<64x128xf32> -> vector<64x128xf32>
    %22 = arith.mulf %19, %21 : vector<64x128xf32>
    %c0_20 = arith.constant 0 : index
    %c0_21 = arith.constant 0 : index
    %23 = vector.load %arg9[%c0_20, %c0_21] : memref<4x64xf32, #tpu.memory_space<vmem>>, vector<4x64xf32>
    %cst_22 = arith.constant dense<0.000000e+00> : vector<4x128xf32>
    %24 = tpu.matmul %23, %22, %cst_22 {dimension_numbers = #tpu.dot_dimension_numbers<[1], [0], [0], [1], [0, 0, 1, 1], [], []>} : vector<4x64xf32>, vector<64x128xf32>, vector<4x128xf32> -> vector<4x128xf32>
    %c0_23 = arith.constant 0 : index
    %c0_24 = arith.constant 0 : index
    %25 = vector.load %arg10[%c0_23, %c0_24] : memref<4x1xf32, #tpu.memory_space<vmem>>, vector<4x1xf32>
    %26 = vector.broadcast %25 : vector<4x1xf32> to vector<4x128xf32>
    %27 = arith.addf %24, %26 : vector<4x128xf32>
    %c0_25 = arith.constant 0 : index
    %c0_26 = arith.constant 0 : index
    %28 = vector.load %arg11[%c0_25, %c0_26] : memref<4x128xf32, #tpu.memory_space<vmem>>, vector<4x128xf32>
    tpu.vector_store %arg11[%c0_25, %c0_26], %27 {strides = array<i32>} : memref<4x128xf32, #tpu.memory_space<vmem>>, vector<4x128xf32>,
    return
  }
  func.func @transform_0(%arg0: i32) -> (i32, i32) {
    %c0_i32 = arith.constant 0 : i32
    %c0_i32_0 = arith.constant 0 : i32
    return %c0_i32, %arg0 : i32, i32
  }
  func.func @transform_1(%arg0: i32) -> (i32, i32) {
    %c0_i32 = arith.constant 0 : i32
    %c0_i32_0 = arith.constant 0 : i32
    %c0_i32_1 = arith.constant 0 : i32
    return %c0_i32, %c0_i32_0 : i32, i32
  }
  func.func @transform_2(%arg0: i32) -> (i32, i32) {
    %c0_i32 = arith.constant 0 : i32
    %c0_i32_0 = arith.constant 0 : i32
    %c0_i32_1 = arith.constant 0 : i32
    return %c0_i32, %c0_i32_0 : i32, i32
  }
  func.func @transform_3(%arg0: i32) -> (i32, i32) {
    %c0_i32 = arith.constant 0 : i32
    %c0_i32_0 = arith.constant 0 : i32
    %c0_i32_1 = arith.constant 0 : i32
    return %c0_i32, %c0_i32_0 : i32, i32
  }
  func.func @transform_4(%arg0: i32) -> (i32, i32) {
    %c0_i32 = arith.constant 0 : i32
    %c0_i32_0 = arith.constant 0 : i32
    %c0_i32_1 = arith.constant 0 : i32
    return %c0_i32, %c0_i32_0 : i32, i32
  }
  func.func @transform_5(%arg0: i32) -> (i32, i32) {
    %c0_i32 = arith.constant 0 : i32
    %c0_i32_0 = arith.constant 0 : i32
    %c0_i32_1 = arith.constant 0 : i32
    return %c0_i32, %c0_i32_0 : i32, i32
  }
  func.func @transform_6(%arg0: i32) -> (i32, i32) {
    %c0_i32 = arith.constant 0 : i32
    %c0_i32_0 = arith.constant 0 : i32
    %c0_i32_1 = arith.constant 0 : i32
    return %c0_i32, %c0_i32_0 : i32, i32
  }
  func.func @transform_7(%arg0: i32) -> (i32, i32) {
    %c0_i32 = arith.constant 0 : i32
    %c0_i32_0 = arith.constant 0 : i32
    %c0_i32_1 = arith.constant 0 : i32
    return %c0_i32, %c0_i32_0 : i32, i32
  }
  func.func @transform_8(%arg0: i32) -> (i32, i32) {
    %c0_i32 = arith.constant 0 : i32
    %c0_i32_0 = arith.constant 0 : i32
    %c0_i32_1 = arith.constant 0 : i32
    return %c0_i32, %c0_i32_0 : i32, i32
  }
  func.func @transform_9(%arg0: i32) -> (i32, i32) {
    %c0_i32 = arith.constant 0 : i32
    %c0_i32_0 = arith.constant 0 : i32
    %c0_i32_1 = arith.constant 0 : i32
    return %c0_i32, %c0_i32_0 : i32, i32
  }
  func.func @transform_10(%arg0: i32) -> (i32, i32) {
    %c0_i32 = arith.constant 0 : i32
    %c0_i32_0 = arith.constant 0 : i32
    return %c0_i32, %arg0 : i32, i32
  }
}

</mosaic_0001>

<llo_original>
// kernel: tpu_custom_call.1
$region0: #{tpu_custom_call.1}
  #allocation0 [shape = 'u32[]', space=smem, size = 0x4, offset = 0x4, fixed_abs, tag = 'smem constant byte address 0x4 - core index']
  #allocation1 [shape = 'u32[72,128]{1,0:T(1,128)}', space=vmem, size = 0x9000, scoped, tag = 'internal scratch']
  %s0 = inlined_call_operand.vmem [shape: f32[16,128], index: 0, kind: input, shape index: {}]
  %s1 = inlined_call_operand.vmem [shape: f32[32,16], index: 1, kind: input, shape index: {}]
  %s2 = inlined_call_operand.vmem [shape: f32[32,1], index: 2, kind: input, shape index: {}]
  %s3 = inlined_call_operand.vmem [shape: f32[32,32], index: 3, kind: input, shape index: {}]
  %s4 = inlined_call_operand.vmem [shape: f32[32,1], index: 4, kind: input, shape index: {}]
  %s5 = inlined_call_operand.vmem [shape: f32[64,32], index: 5, kind: input, shape index: {}]
  %s6 = inlined_call_operand.vmem [shape: f32[64,1], index: 6, kind: input, shape index: {}]
  %s7 = inlined_call_operand.vmem [shape: f32[64,16], index: 7, kind: input, shape index: {}]
  %s8 = inlined_call_operand.vmem [shape: f32[4,64], index: 8, kind: input, shape index: {}]
  %s9 = inlined_call_operand.vmem [shape: f32[4,1], index: 9, kind: input, shape index: {}]
  %s10 = inlined_call_operand.hbm [shape: f32[4,128], index: 10, kind: output, shape index: {}]
  %s11 = sld [smem:[#allocation0]]
  $region50: #{tpu_custom_call.1} parent=0
    _
  %s13 = ssub.s32 1, %s11
  %s14 = scalar_select 0, %s13, %s11
  $region1: #{tpu_custom_call.1} parent=0
    #allocation2 [shape = 'u8[2048]{0}', space=vmem, size = 0x800, scoped, tag = 'output window, operand 0, single buffered']
    #allocation3 [shape = 's32[1]{0}', space=sflag, size = 0x4, scoped, tag = 'scoped memory for tpu_custom_call.1']
    %15 = vsyncpa [#allocation3], 0
    // Predicated region
    $region2: #{tpu_custom_call.1} parent=1 // pred_check
      _
    $region3: #{tpu_custom_call.1} parent=1 // pred_check_branch
      %17 = sbr.rel (0) target = $region5
    $region4: #{tpu_custom_call.1} parent=1 // pred_region
      _
    $region5: #{tpu_custom_call.1} parent=1 // pred_fallthru
      _
    // Predicated region
    $region6: #{tpu_custom_call.1} parent=1 // pred_check
      _
    $region7: #{tpu_custom_call.1} parent=1 // pred_check_branch
      %19 = sbr.rel (0) target = $region9
    $region8: #{tpu_custom_call.1} parent=1 // pred_region
      _
    $region9: #{tpu_custom_call.1} parent=1 // pred_fallthru
      _
    // Predicated region
    $region10: #{tpu_custom_call.1} parent=1 // pred_check
      _
    $region11: #{tpu_custom_call.1} parent=1 // pred_check_branch
      %21 = sbr.rel (0) target = $region13
    $region12: #{tpu_custom_call.1} parent=1 // pred_region
      _
    $region13: #{tpu_custom_call.1} parent=1 // pred_fallthru
      _
    // Predicated region
    $region14: #{tpu_custom_call.1} parent=1 // pred_check
      _
    $region15: #{tpu_custom_call.1} parent=1 // pred_check_branch
      %23 = sbr.rel (0) target = $region17
    $region16: #{tpu_custom_call.1} parent=1 // pred_region
      _
    $region17: #{tpu_custom_call.1} parent=1 // pred_fallthru
      _
    // Predicated region
    $region18: #{tpu_custom_call.1} parent=1 // pred_check
      _
    $region19: #{tpu_custom_call.1} parent=1 // pred_check_branch
      %25 = sbr.rel (0) target = $region21
    $region20: #{tpu_custom_call.1} parent=1 // pred_region
      _
    $region21: #{tpu_custom_call.1} parent=1 // pred_fallthru
      _
    // Predicated region
    $region22: #{tpu_custom_call.1} parent=1 // pred_check
      _
    $region23: #{tpu_custom_call.1} parent=1 // pred_check_branch
      %27 = sbr.rel (0) target = $region25
    $region24: #{tpu_custom_call.1} parent=1 // pred_region
      _
    $region25: #{tpu_custom_call.1} parent=1 // pred_fallthru
      _
    // Predicated region
    $region26: #{tpu_custom_call.1} parent=1 // pred_check
      _
    $region27: #{tpu_custom_call.1} parent=1 // pred_check_branch
      %29 = sbr.rel (0) target = $region29
    $region28: #{tpu_custom_call.1} parent=1 // pred_region
      _
    $region29: #{tpu_custom_call.1} parent=1 // pred_fallthru
      _
    // Predicated region
    $region30: #{tpu_custom_call.1} parent=1 // pred_check
      _
    $region31: #{tpu_custom_call.1} parent=1 // pred_check_branch
      %31 = sbr.rel (0) target = $region33
    $region32: #{tpu_custom_call.1} parent=1 // pred_region
      _
    $region33: #{tpu_custom_call.1} parent=1 // pred_fallthru
      _
    // Predicated region
    $region34: #{tpu_custom_call.1} parent=1 // pred_check
      _
    $region35: #{tpu_custom_call.1} parent=1 // pred_check_branch
      %33 = sbr.rel (0) target = $region37
    $region36: #{tpu_custom_call.1} parent=1 // pred_region
      _
    $region37: #{tpu_custom_call.1} parent=1 // pred_fallthru
      _
    // Predicated region
    $region38: #{tpu_custom_call.1} parent=1 // pred_check
      _
    $region39: #{tpu_custom_call.1} parent=1 // pred_check_branch
      %35 = sbr.rel (0) target = $region41
    $region40: #{tpu_custom_call.1} parent=1 // pred_region
      _
    $region41: #{tpu_custom_call.1} parent=1 // pred_fallthru
      _
    %v36 = vld [vmem:[%s0] sm:$0xff]
    %v37 = vld [vmem:[%s0 + $0x8] sm:$0xff]
    %v38 = vld [vmem:[%s1] sm:$0xff]
    %v39 = vld [vmem:[%s1 + $0x8] sm:$0xff]
    %v40 = vld [vmem:[%s1 + $0x10] sm:$0xff]
    %v41 = vld [vmem:[%s1 + $0x18] sm:$0xff]
    %v42 = vld [vmem:[%s2] sm:$0xff]
    %v43 = vld [vmem:[%s2 + $0x8] sm:$0xff]
    %v44 = vld [vmem:[%s2 + $0x10] sm:$0xff]
    %v45 = vld [vmem:[%s2 + $0x18] sm:$0xff]
    %47 = vset.pattern.permute.xlu0 0
    %48 = vperm.xlu0 %47, %v42
    %v49 = vpop.permute.xlu0 %48
    %52 = vset.pattern.permute.xlu0 0
    %53 = vperm.xlu0 %52, %v43
    %v54 = vpop.permute.xlu0 %53
    %57 = vset.pattern.permute.xlu0 0
    %58 = vperm.xlu0 %57, %v44
    %v59 = vpop.permute.xlu0 %58
    %62 = vset.pattern.permute.xlu0 0
    %63 = vperm.xlu0 %62, %v45
    %v64 = vpop.permute.xlu0 %63
    %vm66 = vcmask 130048
    %v68 = vsel %vm66, %v38, 0
    %v71 = vsel %vm66, %v39, 0
    %v74 = vsel %vm66, %v40, 0
    %v77 = vsel %vm66, %v41, 0
    %79 = vmatpush.msra.mxu0 0.0
    %80 = vmatpush.msra.mxu0 0.0
    %81 = vmatpush.msra.mxu0 0.0
    %82 = vmatpush.msra.mxu0 0.0
    %83 = vmatpush.msra.mxu0 0.0
    %84 = vmatpush.msra.mxu0 0.0
    %85 = vmatpush.msra.mxu0 0.0
    %86 = vmatpush.msra.mxu0 0.0
    %87 = vmatpush.msra.mxu0 0.0
    %88 = vmatpush.msra.mxu0 0.0
    %89 = vmatpush.msra.mxu0 0.0
    %90 = vmatpush.msra.mxu0 0.0
    %91 = vmatpush.msra.mxu0 0.0
    %92 = vmatpush.msra.mxu0 0.0
    %93 = vmatpush.msra.mxu0 %v37
    %94 = vmatpush.msra.mxu0 %v36
    %95 = vmatmul.f32.gmra.mxu0 %v68
    %v96 = vpop.f32.mrf.mxu0
    %v97 = vadd.f32 %v49, %v96
    %98 = vmatmul.f32.gmra.mxu0 %v71
    %v99 = vpop.f32.mrf.mxu0
    %v100 = vadd.f32 %v54, %v99
    %101 = vmatmul.f32.gmra.mxu0 %v74
    %v102 = vpop.f32.mrf.mxu0
    %v103 = vadd.f32 %v59, %v102
    %104 = vmatmul.f32.gmra.mxu0 %v77
    %v105 = vpop.f32.mrf.mxu0
    %v106 = vadd.f32 %v64, %v105
    %107 = vdwg.mxu0
    %v108 = vmax.f32 %v97, 0.0
    %v109 = vmax.f32 %v100, 0.0
    %v110 = vmax.f32 %v103, 0.0
    %v111 = vmax.f32 %v106, 0.0
    %v112 = vld [vmem:[%s3] sm:$0xff]
    %v113 = vld [vmem:[%s3 + $0x8] sm:$0xff]
    %v114 = vld [vmem:[%s3 + $0x10] sm:$0xff]
    %v115 = vld [vmem:[%s3 + $0x18] sm:$0xff]
    %v116 = vld [vmem:[%s4] sm:$0xff]
    %v117 = vld [vmem:[%s4 + $0x8] sm:$0xff]
    %v118 = vld [vmem:[%s4 + $0x10] sm:$0xff]
    %v119 = vld [vmem:[%s4 + $0x18] sm:$0xff]
    %121 = vset.pattern.permute.xlu0 0
    %122 = vperm.xlu0 %121, %v116
    %v123 = vpop.permute.xlu0 %122
    %126 = vset.pattern.permute.xlu0 0
    %127 = vperm.xlu0 %126, %v117
    %v128 = vpop.permute.xlu0 %127
    %131 = vset.pattern.permute.xlu0 0
    %132 = vperm.xlu0 %131, %v118
    %v133 = vpop.permute.xlu0 %132
    %136 = vset.pattern.permute.xlu0 0
    %137 = vperm.xlu0 %136, %v119
    %v138 = vpop.permute.xlu0 %137
    %vm140 = vcmask 261120
    %v142 = vsel %vm140, %v112, 0
    %v145 = vsel %vm140, %v113, 0
    %v148 = vsel %vm140, %v114, 0
    %v151 = vsel %vm140, %v115, 0
    %153 = vmatpush.msra.mxu0 0.0
    %154 = vmatpush.msra.mxu0 0.0
    %155 = vmatpush.msra.mxu0 0.0
    %156 = vmatpush.msra.mxu0 0.0
    %157 = vmatpush.msra.mxu0 0.0
    %158 = vmatpush.msra.mxu0 0.0
    %159 = vmatpush.msra.mxu0 0.0
    %160 = vmatpush.msra.mxu0 0.0
    %161 = vmatpush.msra.mxu0 0.0
    %162 = vmatpush.msra.mxu0 0.0
    %163 = vmatpush.msra.mxu0 0.0
    %164 = vmatpush.msra.mxu0 0.0
    %165 = vmatpush.msra.mxu0 %v111
    %166 = vmatpush.msra.mxu0 %v110
    %167 = vmatpush.msra.mxu0 %v109
    %168 = vmatpush.msra.mxu0 %v108
    %169 = vmatmul.f32.gmra.mxu0 %v142
    %v170 = vpop.f32.mrf.mxu0
    %v171 = vadd.f32 %v123, %v170
    %172 = vmatmul.f32.gmra.mxu0 %v145
    %v173 = vpop.f32.mrf.mxu0
    %v174 = vadd.f32 %v128, %v173
    %175 = vmatmul.f32.gmra.mxu0 %v148
    %v176 = vpop.f32.mrf.mxu0
    %v177 = vadd.f32 %v133, %v176
    %178 = vmatmul.f32.gmra.mxu0 %v151
    %v179 = vpop.f32.mrf.mxu0
    %v180 = vadd.f32 %v138, %v179
    %181 = vdwg.mxu0
    %v182 = vmax.f32 %v171, 0.0
    %v183 = vmax.f32 %v174, 0.0
    %v184 = vmax.f32 %v177, 0.0
    %v185 = vmax.f32 %v180, 0.0
    %v186 = vld [vmem:[%s5] sm:$0xff]
    %v187 = vld [vmem:[%s5 + $0x8] sm:$0xff]
    %v188 = vld [vmem:[%s5 + $0x10] sm:$0xff]
    %v189 = vld [vmem:[%s5 + $0x18] sm:$0xff]
    %v190 = vld [vmem:[%s5 + $0x20] sm:$0xff]
    %v191 = vld [vmem:[%s5 + $0x28] sm:$0xff]
    %v192 = vld [vmem:[%s5 + $0x30] sm:$0xff]
    %v193 = vld [vmem:[%s5 + $0x38] sm:$0xff]
    %v194 = vld [vmem:[%s6] sm:$0xff]
    %v195 = vld [vmem:[%s6 + $0x8] sm:$0xff]
    %v196 = vld [vmem:[%s6 + $0x10] sm:$0xff]
    %v197 = vld [vmem:[%s6 + $0x18] sm:$0xff]
    %v198 = vld [vmem:[%s6 + $0x20] sm:$0xff]
    %v199 = vld [vmem:[%s6 + $0x28] sm:$0xff]
    %v200 = vld [vmem:[%s6 + $0x30] sm:$0xff]
    %v201 = vld [vmem:[%s6 + $0x38] sm:$0xff]
    %203 = vset.pattern.permute.xlu0 0
    %204 = vperm.xlu0 %203, %v194
    %v205 = vpop.permute.xlu0 %204
    %208 = vset.pattern.permute.xlu0 0
    %209 = vperm.xlu0 %208, %v195
    %v210 = vpop.permute.xlu0 %209
    %213 = vset.pattern.permute.xlu0 0
    %214 = vperm.xlu0 %213, %v196
    %v215 = vpop.permute.xlu0 %214
    %218 = vset.pattern.permute.xlu0 0
    %219 = vperm.xlu0 %218, %v197
    %v220 = vpop.permute.xlu0 %219
    %223 = vset.pattern.permute.xlu0 0
    %224 = vperm.xlu0 %223, %v198
    %v225 = vpop.permute.xlu0 %224
    %228 = vset.pattern.permute.xlu0 0
    %229 = vperm.xlu0 %228, %v199
    %v230 = vpop.permute.xlu0 %229
    %233 = vset.pattern.permute.xlu0 0
    %234 = vperm.xlu0 %233, %v200
    %v235 = vpop.permute.xlu0 %234
    %238 = vset.pattern.permute.xlu0 0
    %239 = vperm.xlu0 %238, %v201
    %v240 = vpop.permute.xlu0 %239
    %v243 = vsel %vm140, %v186, 0
    %v246 = vsel %vm140, %v187, 0
    %v249 = vsel %vm140, %v188, 0
    %v252 = vsel %vm140, %v189, 0
    %v255 = vsel %vm140, %v190, 0
    %v258 = vsel %vm140, %v191, 0
    %v261 = vsel %vm140, %v192, 0
    %v264 = vsel %vm140, %v193, 0
    %266 = vmatpush.msra.mxu0 0.0
    %267 = vmatpush.msra.mxu0 0.0
    %268 = vmatpush.msra.mxu0 0.0
    %269 = vmatpush.msra.mxu0 0.0
    %270 = vmatpush.msra.mxu0 0.0
    %271 = vmatpush.msra.mxu0 0.0
    %272 = vmatpush.msra.mxu0 0.0
    %273 = vmatpush.msra.mxu0 0.0
    %274 = vmatpush.msra.mxu0 0.0
    %275 = vmatpush.msra.mxu0 0.0
    %276 = vmatpush.msra.mxu0 0.0
    %277 = vmatpush.msra.mxu0 0.0
    %278 = vmatpush.msra.mxu0 %v185
    %279 = vmatpush.msra.mxu0 %v184
    %280 = vmatpush.msra.mxu0 %v183
    %281 = vmatpush.msra.mxu0 %v182
    %282 = vmatmul.f32.gmra.mxu0 %v243
    %v283 = vpop.f32.mrf.mxu0
    %v284 = vadd.f32 %v205, %v283
    %285 = vmatmul.f32.gmra.mxu0 %v246
    %v286 = vpop.f32.mrf.mxu0
    %v287 = vadd.f32 %v210, %v286
    %288 = vmatmul.f32.gmra.mxu0 %v249
    %v289 = vpop.f32.mrf.mxu0
    %v290 = vadd.f32 %v215, %v289
    %291 = vmatmul.f32.gmra.mxu0 %v252
    %v292 = vpop.f32.mrf.mxu0
    %v293 = vadd.f32 %v220, %v292
    %294 = vmatmul.f32.gmra.mxu0 %v255
    %v295 = vpop.f32.mrf.mxu0
    %v296 = vadd.f32 %v225, %v295
    %297 = vmatmul.f32.gmra.mxu0 %v258
    %v298 = vpop.f32.mrf.mxu0
    %v299 = vadd.f32 %v230, %v298
    %300 = vmatmul.f32.gmra.mxu0 %v261
    %v301 = vpop.f32.mrf.mxu0
    %v302 = vadd.f32 %v235, %v301
    %303 = vmatmul.f32.gmra.mxu0 %v264
    %v304 = vpop.f32.mrf.mxu0
    %v305 = vadd.f32 %v240, %v304
    %306 = vdwg.mxu0
    %v307 = vld [vmem:[%s7] sm:$0xff]
    %v308 = vld [vmem:[%s7 + $0x8] sm:$0xff]
    %v309 = vld [vmem:[%s7 + $0x10] sm:$0xff]
    %v310 = vld [vmem:[%s7 + $0x18] sm:$0xff]
    %v311 = vld [vmem:[%s7 + $0x20] sm:$0xff]
    %v312 = vld [vmem:[%s7 + $0x28] sm:$0xff]
    %v313 = vld [vmem:[%s7 + $0x30] sm:$0xff]
    %v314 = vld [vmem:[%s7 + $0x38] sm:$0xff]
    %v316 = vsel %vm66, %v307, 0
    %v319 = vsel %vm66, %v308, 0
    %v322 = vsel %vm66, %v309, 0
    %v325 = vsel %vm66, %v310, 0
    %v328 = vsel %vm66, %v311, 0
    %v331 = vsel %vm66, %v312, 0
    %v334 = vsel %vm66, %v313, 0
    %v337 = vsel %vm66, %v314, 0
    %339 = vmatpush.msra.mxu0 0.0
    %340 = vmatpush.msra.mxu0 0.0
    %341 = vmatpush.msra.mxu0 0.0
    %342 = vmatpush.msra.mxu0 0.0
    %343 = vmatpush.msra.mxu0 0.0
    %344 = vmatpush.msra.mxu0 0.0
    %345 = vmatpush.msra.mxu0 0.0
    %346 = vmatpush.msra.mxu0 0.0
    %347 = vmatpush.msra.mxu0 0.0
    %348 = vmatpush.msra.mxu0 0.0
    %349 = vmatpush.msra.mxu0 0.0
    %350 = vmatpush.msra.mxu0 0.0
    %351 = vmatpush.msra.mxu0 0.0
    %352 = vmatpush.msra.mxu0 0.0
    %353 = vmatpush.msra.mxu0 %v37
    %354 = vmatpush.msra.mxu0 %v36
    %355 = vmatmul.f32.gmra.mxu0 %v316
    %v356 = vpop.f32.mrf.mxu0
    %v357 = vadd.f32 0.0, %v356
    %358 = vmatmul.f32.gmra.mxu0 %v319
    %v359 = vpop.f32.mrf.mxu0
    %v360 = vadd.f32 0.0, %v359
    %361 = vmatmul.f32.gmra.mxu0 %v322
    %v362 = vpop.f32.mrf.mxu0
    %v363 = vadd.f32 0.0, %v362
    %364 = vmatmul.f32.gmra.mxu0 %v325
    %v365 = vpop.f32.mrf.mxu0
    %v366 = vadd.f32 0.0, %v365
    %367 = vmatmul.f32.gmra.mxu0 %v328
    %v368 = vpop.f32.mrf.mxu0
    %v369 = vadd.f32 0.0, %v368
    %370 = vmatmul.f32.gmra.mxu0 %v331
    %v371 = vpop.f32.mrf.mxu0
    %v372 = vadd.f32 0.0, %v371
    %373 = vmatmul.f32.gmra.mxu0 %v334
    %v374 = vpop.f32.mrf.mxu0
    %v375 = vadd.f32 0.0, %v374
    %376 = vmatmul.f32.gmra.mxu0 %v337
    %v377 = vpop.f32.mrf.mxu0
    %v378 = vadd.f32 0.0, %v377
    %379 = vdwg.mxu0
    %v380 = vmul.f32 %v284, %v357
    %v381 = vmul.f32 %v287, %v360
    %v382 = vmul.f32 %v290, %v363
    %v383 = vmul.f32 %v293, %v366
    %v384 = vmul.f32 %v296, %v369
    %v385 = vmul.f32 %v299, %v372
    %v386 = vmul.f32 %v302, %v375
    %v387 = vmul.f32 %v305, %v378
    %v388 = vld [vmem:[%s8] sm:$0xf]
    %v389 = vld [vmem:[%s9] sm:$0xf]
    %391 = vset.pattern.permute.xlu0 0
    %392 = vperm.xlu0 %391, %v389
    %v393 = vpop.permute.xlu0 %392
    %vm395 = vcmask 523264
    %v397 = vsel %vm395, %v388, 0
    %399 = vmatpush.msra.mxu0 0.0
    %400 = vmatpush.msra.mxu0 0.0
    %401 = vmatpush.msra.mxu0 0.0
    %402 = vmatpush.msra.mxu0 0.0
    %403 = vmatpush.msra.mxu0 0.0
    %404 = vmatpush.msra.mxu0 0.0
    %405 = vmatpush.msra.mxu0 0.0
    %406 = vmatpush.msra.mxu0 0.0
    %407 = vmatpush.msra.mxu0 %v387
    %408 = vmatpush.msra.mxu0 %v386
    %409 = vmatpush.msra.mxu0 %v385
    %410 = vmatpush.msra.mxu0 %v384
    %411 = vmatpush.msra.mxu0 %v383
    %412 = vmatpush.msra.mxu0 %v382
    %413 = vmatpush.msra.mxu0 %v381
    %414 = vmatpush.msra.mxu0 %v380
    %415 = vmatmul.f32.gmra.mxu0 %v397
    %v416 = vpop.f32.mrf.mxu0
    %v417 = vadd.f32 %v393, %v416
    %418 = vdwg.mxu0
    %419 = vst [vmem:[#allocation2] sm:$0xf] %v417
    // Predicated region
    $region42: #{tpu_custom_call.1} parent=1 // pred_check
      _
    $region43: #{tpu_custom_call.1} parent=1 // pred_check_branch
      %421 = sbr.rel (0) target = $region45
    $region44: #{tpu_custom_call.1} parent=1 // pred_region
      %423 = vsyncadd [#allocation3], 0
      %s425 = sshll.u32 [#allocation2], 4
      %s426 = int_to_ptr.vmem [resolvable:$true] %s425
      %s427 = sshll.u32 %s10, 4
      %s428 = int_to_ptr.hbm [resolvable:$true] %s427
      %430 = dma.vmem_to_hbm [thread:$0]  %s426, 64, %s428, [#allocation3]
    $region45: #{tpu_custom_call.1} parent=1 // pred_fallthru
      _
    // Predicated region
    $region46: #{tpu_custom_call.1} parent=1 // pred_check
      _
    $region47: #{tpu_custom_call.1} parent=1 // pred_check_branch
      %432 = sbr.rel (0) target = $region49
    $region48: #{tpu_custom_call.1} parent=1 // pred_region
      %434 = dma.done [#allocation3], 64
    $region49: #{tpu_custom_call.1} parent=1 // pred_fallthru
      _
    %435 = vsyncpa [#allocation3], 1

</llo_original>
